<compile_context>
chip_gen: v6e
topology: v6e:2x2x1
jax: 0.10.0
libtpu: 0.0.40
codegen_flags: <defaults>
</compile_context>

<pallas_src>
import math

import jax
import jax.numpy as jnp
from jax import lax
from jax.experimental import pallas as pl
from jax.experimental.pallas import tpu as pltpu

BN_EPS = 1e-5
LANE = 128
SUBLANE = 8


def _round_up(v, m):
    return ((v + m - 1) // m) * m


def _nbytes(shape, dtype):
    return math.prod(shape) * jnp.dtype(dtype).itemsize


def _mlp2_kernel(x_ref, w1_ref, w2_ref, w3_ref, b_ref, out_ref):
    """Fused lin1->ReLU->(BN1 folded)->lin2->ReLU->(BN2 folded)->lin3."""
    h1_w = w1_ref.shape[1]
    h2_w = w2_ref.shape[1]
    out_w = w3_ref.shape[1]
    b = b_ref[...]  # (3, maxw) f32: stacked b1, b2', b3'

    # lin1 -> ReLU   (dropout is identity in eval mode)
    h = jnp.dot(x_ref[...], w1_ref[...], preferred_element_type=jnp.float32)
    h = jnp.maximum(h + b[0:1, :h1_w], 0.0)
    # lin2 (BN1 folded into W2'/b2') -> ReLU
    h = jnp.dot(h.astype(w2_ref.dtype), w2_ref[...],
                preferred_element_type=jnp.float32)
    h = jnp.maximum(h + b[1:2, :h2_w], 0.0)
    # lin3 (BN2 folded into W3'/b3'), lane-dense padded output store
    out = jnp.dot(h.astype(w3_ref.dtype), w3_ref[...],
                  preferred_element_type=jnp.float32)
    out_ref[...] = (out + b[2:3, :out_w]).astype(out_ref.dtype)
    # TODO(synk): training-mode dropout (PRNG mask) and batch-statistics BN are
    # not emitted; the kernel implements eval-mode semantics only.


def prepare_params(params, *, compute_dtype=jnp.bfloat16):
    """One-time parameter prep: fold eval-mode BN into the next layer's
    weights, pad output-feature axes to lane multiples, cast MXU operands."""
    f32 = jnp.float32
    in_f, h1_f = params["w1"].shape
    h2_f = params["w2"].shape[1]
    out_f = params["w3"].shape[1]

    h1_p = _round_up(h1_f, LANE)
    h2_p = _round_up(h2_f, LANE)
    out_p = _round_up(out_f, LANE)
    maxw = max(h1_p, h2_p, out_p)

    def fold(gamma, beta, mean, var):
        s = gamma.astype(f32) * lax.rsqrt(var.astype(f32) + BN_EPS)
        t = beta.astype(f32) - mean.astype(f32) * s
        return s, t

    s1, t1 = fold(params["bn1_gamma"], params["bn1_beta"],
                  params["bn1_mean"], params["bn1_var"])
    s2, t2 = fold(params["bn2_gamma"], params["bn2_beta"],
                  params["bn2_mean"], params["bn2_var"])

    # Fold BN scale/shift into the following linear layer (exact in f32).
    w1 = params["w1"].astype(f32)
    b1 = params["b1"].astype(f32)
    w2 = s1[:, None] * params["w2"].astype(f32)
    b2 = params["b2"].astype(f32) + t1 @ params["w2"].astype(f32)
    w3 = s2[:, None] * params["w3"].astype(f32)
    b3 = params["b3"].astype(f32) + t2 @ params["w3"].astype(f32)

    def pad_cast(w, rows, cols):
        w = jnp.pad(w, ((0, rows - w.shape[0]), (0, cols - w.shape[1])))
        return w.astype(compute_dtype)

    # Zero pads keep padded hidden/output columns exactly zero through the net.
    w1p = pad_cast(w1, in_f, h1_p)     # K axis (in_f) left unpadded: x is unpadded
    w2p = pad_cast(w2, h1_p, h2_p)
    w3p = pad_cast(w3, h2_p, out_p)

    bias = jnp.zeros((3, maxw), f32)
    bias = bias.at[0, :h1_f].set(b1)
    bias = bias.at[1, :h2_f].set(b2)
    bias = bias.at[2, :out_f].set(b3)

    return {"w1": w1p, "w2": w2p, "w3": w3p, "bias": bias,
            "out_features": out_f}


def _choose_tm(n8, tm_req):
    tm = max(SUBLANE, min(_round_up(tm_req, SUBLANE), n8))
    # Keep at least 2 grid steps when the batch allows it so the "parallel"
    # row axis can be sharded across both TensorCores on v7x.
    if n8 // tm < 2 and n8 >= 2 * SUBLANE:
        tm = _round_up(pl.cdiv(n8, 2), SUBLANE)
    return tm


def mlp2_forward(x, prep, edge_index=None, *, tm=512):
    del edge_index  # present in MLP2.forward's signature but unused by the model
    n, in_f = x.shape
    w1, w2, w3, bias = prep["w1"], prep["w2"], prep["w3"], prep["bias"]
    out_f = prep["out_features"]
    out_p = w3.shape[1]
    compute_dtype = w1.dtype
    f32 = jnp.float32

    n8 = _round_up(max(n, SUBLANE), SUBLANE)
    tm = _choose_tm(n8, tm)
    n_pad = _round_up(n, tm)
    grid = n_pad // tm

    xp = x.astype(compute_dtype)
    if n_pad != n:
        xp = jnp.pad(xp, ((0, n_pad - n), (0, 0)))   # row pad only (no 8x feature pad)

    # Explicit VMEM budget: double-buffered operands + generous scratch headroom.
    operand_bytes = (
        2 * (_nbytes(w1.shape, w1.dtype) + _nbytes(w2.shape, w2.dtype)
             + _nbytes(w3.shape, w3.dtype) + _nbytes(bias.shape, bias.dtype))
        + 2 * _nbytes((tm, in_f), compute_dtype)
        + 2 * _nbytes((tm, out_p), f32))
    vmem_limit = min(128 << 20, operand_bytes + (8 << 20))

    full = lambda a: pl.BlockSpec(a.shape, lambda i: (0, 0))

    out = pl.pallas_call(
        _mlp2_kernel,
        out_shape=jax.ShapeDtypeStruct((n_pad, out_p), f32),
        grid=(grid,),
        in_specs=[
            pl.BlockSpec((tm, in_f), lambda i: (i, 0)),   # x row tile (unpadded features)
            full(w1), full(w2), full(w3), full(bias),     # loop-invariant weights/biases
        ],
        out_specs=pl.BlockSpec((tm, out_p), lambda i: (i, 0)),
        compiler_params=pltpu.CompilerParams(
            dimension_semantics=("parallel",),
            vmem_limit_bytes=int(vmem_limit)),
    )(xp, w1, w2, w3, bias)

    return out[:n, :out_f]


def init_params(key, in_f, h1_f, h2_f, out_f):
    ks = jax.random.split(key, 14)

    def lin(kw, kb, fan_in, fan_out):
        s = 1.0 / jnp.sqrt(jnp.float32(fan_in))
        w = jax.random.uniform(kw, (fan_in, fan_out), jnp.float32, -s, s)
        b = jax.random.uniform(kb, (fan_out,), jnp.float32, -s, s)
        return w, b

    w1, b1 = lin(ks[0], ks[1], in_f, h1_f)
    w2, b2 = lin(ks[2], ks[3], h1_f, h2_f)
    w3, b3 = lin(ks[4], ks[5], h2_f, out_f)
    return {
        "w1": w1, "b1": b1, "w2": w2, "b2": b2, "w3": w3, "b3": b3,
        # BatchNorm1d affine + running stats (non-trivial to exercise folding)
        "bn1_gamma": jax.random.uniform(ks[6], (h1_f,), jnp.float32, 0.5, 1.5),
        "bn1_beta": 0.1 * jax.random.normal(ks[7], (h1_f,), jnp.float32),
        "bn1_mean": 0.1 * jax.random.normal(ks[8], (h1_f,), jnp.float32),
        "bn1_var": jax.random.uniform(ks[9], (h1_f,), jnp.float32, 0.5, 1.5),
        "bn2_gamma": jax.random.uniform(ks[10], (h2_f,), jnp.float32, 0.5, 1.5),
        "bn2_beta": 0.1 * jax.random.normal(ks[11], (h2_f,), jnp.float32),
        "bn2_mean": 0.1 * jax.random.normal(ks[12], (h2_f,), jnp.float32),
        "bn2_var": jax.random.uniform(ks[13], (h2_f,), jnp.float32, 0.5, 1.5),
    }


def reference_forward(x, params):
    def bn(h, g, b, m, v):
        return (h - m) * (g * lax.rsqrt(v + BN_EPS)) + b

    h = jnp.maximum(x @ params["w1"] + params["b1"], 0.0)
    h = bn(h, params["bn1_gamma"], params["bn1_beta"],
           params["bn1_mean"], params["bn1_var"])
    h = jnp.maximum(h @ params["w2"] + params["b2"], 0.0)
    h = bn(h, params["bn2_gamma"], params["bn2_beta"],
           params["bn2_mean"], params["bn2_var"])
    return h @ params["w3"] + params["b3"]


if __name__ == "__main__":
    in_f, h1_f, h2_f, out_f = 16, 32, 16, 8
    batch = 256
    p_dropout = 0.5  # eval mode -> dropout is identity

    key = jax.random.PRNGKey(0)
    kx, ke, kp = jax.random.split(key, 3)
    x = jax.random.normal(kx, (batch, in_f), jnp.float32)
    # edge_index exists in the module's forward signature but is never used.
    edge_index = jax.random.randint(ke, (2, 64), 0, batch, dtype=jnp.int32)
    params = init_params(kp, in_f, h1_f, h2_f, out_f)

    prep = prepare_params(params)  # one-time: fold BN, pad, cast to bf16
    fwd = jax.jit(lambda xx: mlp2_forward(xx, prep, edge_index))

    out = jax.block_until_ready(fwd(x))
    ref = reference_forward(x, params)

    assert out.shape == (batch, out_f)
    # bf16 MXU operands with f32 accumulation: expect <~1% relative error.
    rel = jnp.linalg.norm(out - ref) / jnp.linalg.norm(ref)
    assert rel < 2e-2, float(rel)
    assert jnp.allclose(out, ref, atol=5e-2, rtol=5e-2)
    print("KERNEL_OK")
</pallas_src>

<mosaic_0001>
module attributes {stable_mosaic.version = 11 : i64} {
  func.func @_mlp2_kernel(%arg0: i32, %arg1: memref<128x16xbf16, #tpu.memory_space<vmem>>, %arg2: memref<16x128xbf16, #tpu.memory_space<vmem>>, %arg3: memref<128x128xbf16, #tpu.memory_space<vmem>>, %arg4: memref<128x128xbf16, #tpu.memory_space<vmem>>, %arg5: memref<3x128xf32, #tpu.memory_space<vmem>>, %arg6: memref<128x128xf32, #tpu.memory_space<vmem>>) attributes {dimension_semantics = [#tpu.dimension_semantics<parallel>], iteration_bounds = array<i64: 2>, scalar_prefetch = 0 : i64, scratch_operands = 0 : i64, tpu.core_type = #tpu.core_type<tc>, window_params = [{transform_indices = @transform_0, window_bounds = array<i64: 128, 16>}, {pipeline_mode = #tpu.pipeline_mode<synchronous>, transform_indices = @transform_1, window_bounds = array<i64: 16, 128>}, {pipeline_mode = #tpu.pipeline_mode<synchronous>, transform_indices = @transform_2, window_bounds = array<i64: 128, 128>}, {pipeline_mode = #tpu.pipeline_mode<synchronous>, transform_indices = @transform_3, window_bounds = array<i64: 128, 128>}, {pipeline_mode = #tpu.pipeline_mode<synchronous>, transform_indices = @transform_4, window_bounds = array<i64: 3, 128>}, {transform_indices = @transform_5, window_bounds = array<i64: 128, 128>}]} {
    %c0 = arith.constant 0 : index
    %c0_0 = arith.constant 0 : index
    %0 = vector.load %arg5[%c0, %c0_0] : memref<3x128xf32, #tpu.memory_space<vmem>>, vector<3x128xf32>
    %c0_1 = arith.constant 0 : index
    %c0_2 = arith.constant 0 : index
    %1 = vector.load %arg1[%c0_1, %c0_2] : memref<128x16xbf16, #tpu.memory_space<vmem>>, vector<128x16xbf16>
    %c0_3 = arith.constant 0 : index
    %c0_4 = arith.constant 0 : index
    %2 = vector.load %arg2[%c0_3, %c0_4] : memref<16x128xbf16, #tpu.memory_space<vmem>>, vector<16x128xbf16>
    %cst = arith.constant dense<0.000000e+00> : vector<128x128xf32>
    %3 = tpu.matmul %1, %2, %cst {dimension_numbers = #tpu.dot_dimension_numbers<[1], [0], [0], [1], [0, 0, 1, 1], [], []>} : vector<128x16xbf16>, vector<16x128xbf16>, vector<128x128xf32> -> vector<128x128xf32>
    %4 = vector.extract_strided_slice %0 {offsets = [0, 0], sizes = [1, 128], strides = [1, 1]} : vector<3x128xf32> to vector<1x128xf32>
    %5 = vector.broadcast %4 : vector<1x128xf32> to vector<128x128xf32>
    %6 = arith.addf %3, %5 : vector<128x128xf32>
    %cst_5 = arith.constant 0.000000e+00 : f32
    %7 = vector.broadcast %cst_5 : f32 to vector<128x128xf32>
    %8 = arith.maximumf %6, %7 : vector<128x128xf32>
    %9 = arith.truncf %8 : vector<128x128xf32> to vector<128x128xbf16>
    %c0_6 = arith.constant 0 : index
    %c0_7 = arith.constant 0 : index
    %10 = vector.load %arg3[%c0_6, %c0_7] : memref<128x128xbf16, #tpu.memory_space<vmem>>, vector<128x128xbf16>
    %cst_8 = arith.constant dense<0.000000e+00> : vector<128x128xf32>
    %11 = tpu.matmul %9, %10, %cst_8 {dimension_numbers = #tpu.dot_dimension_numbers<[1], [0], [0], [1], [0, 0, 1, 1], [], []>} : vector<128x128xbf16>, vector<128x128xbf16>, vector<128x128xf32> -> vector<128x128xf32>
    %12 = vector.extract_strided_slice %0 {offsets = [1, 0], sizes = [1, 128], strides = [1, 1]} : vector<3x128xf32> to vector<1x128xf32>
    %13 = vector.broadcast %12 : vector<1x128xf32> to vector<128x128xf32>
    %14 = arith.addf %11, %13 : vector<128x128xf32>
    %cst_9 = arith.constant 0.000000e+00 : f32
    %15 = vector.broadcast %cst_9 : f32 to vector<128x128xf32>
    %16 = arith.maximumf %14, %15 : vector<128x128xf32>
    %17 = arith.truncf %16 : vector<128x128xf32> to vector<128x128xbf16>
    %c0_10 = arith.constant 0 : index
    %c0_11 = arith.constant 0 : index
    %18 = vector.load %arg4[%c0_10, %c0_11] : memref<128x128xbf16, #tpu.memory_space<vmem>>, vector<128x128xbf16>
    %cst_12 = arith.constant dense<0.000000e+00> : vector<128x128xf32>
    %19 = tpu.matmul %17, %18, %cst_12 {dimension_numbers = #tpu.dot_dimension_numbers<[1], [0], [0], [1], [0, 0, 1, 1], [], []>} : vector<128x128xbf16>, vector<128x128xbf16>, vector<128x128xf32> -> vector<128x128xf32>
    %20 = vector.extract_strided_slice %0 {offsets = [2, 0], sizes = [1, 128], strides = [1, 1]} : vector<3x128xf32> to vector<1x128xf32>
    %21 = vector.broadcast %20 : vector<1x128xf32> to vector<128x128xf32>
    %22 = arith.addf %19, %21 : vector<128x128xf32>
    %c0_13 = arith.constant 0 : index
    %c0_14 = arith.constant 0 : index
    %23 = vector.load %arg6[%c0_13, %c0_14] : memref<128x128xf32, #tpu.memory_space<vmem>>, vector<128x128xf32>
    tpu.vector_store %arg6[%c0_13, %c0_14], %22 {strides = array<i32>} : memref<128x128xf32, #tpu.memory_space<vmem>>, vector<128x128xf32>,
    return
  }
  func.func @transform_0(%arg0: i32) -> (i32, i32) {
    %c0_i32 = arith.constant 0 : i32
    %c0_i32_0 = arith.constant 0 : i32
    return %arg0, %c0_i32 : i32, i32
  }
  func.func @transform_1(%arg0: i32) -> (i32, i32) {
    %c0_i32 = arith.constant 0 : i32
    %c0_i32_0 = arith.constant 0 : i32
    %c0_i32_1 = arith.constant 0 : i32
    return %c0_i32, %c0_i32_0 : i32, i32
  }
  func.func @transform_2(%arg0: i32) -> (i32, i32) {
    %c0_i32 = arith.constant 0 : i32
    %c0_i32_0 = arith.constant 0 : i32
    %c0_i32_1 = arith.constant 0 : i32
    return %c0_i32, %c0_i32_0 : i32, i32
  }
  func.func @transform_3(%arg0: i32) -> (i32, i32) {
    %c0_i32 = arith.constant 0 : i32
    %c0_i32_0 = arith.constant 0 : i32
    %c0_i32_1 = arith.constant 0 : i32
    return %c0_i32, %c0_i32_0 : i32, i32
  }
  func.func @transform_4(%arg0: i32) -> (i32, i32) {
    %c0_i32 = arith.constant 0 : i32
    %c0_i32_0 = arith.constant 0 : i32
    %c0_i32_1 = arith.constant 0 : i32
    return %c0_i32, %c0_i32_0 : i32, i32
  }
  func.func @transform_5(%arg0: i32) -> (i32, i32) {
    %c0_i32 = arith.constant 0 : i32
    %c0_i32_0 = arith.constant 0 : i32
    return %arg0, %c0_i32 : i32, i32
  }
}

</mosaic_0001>

<llo_original>
// kernel: _lambda_.1
$region0: #{_lambda_.1}
  #allocation0 [shape = 'u32[]', space=smem, size = 0x4, offset = 0x4, fixed_abs, tag = 'smem constant byte address 0x4 - core index']
  #allocation1 [shape = 'u32[144,128]{1,0:T(1,128)}', space=vmem, size = 0x12000, scoped, tag = 'internal scratch']
  %s0 = inlined_call_operand.vmem [shape: bf16[256,16], index: 0, kind: input, shape index: {}]
  %s1 = inlined_call_operand.vmem [shape: bf16[16,128], index: 1, kind: input, shape index: {}]
  %s2 = inlined_call_operand.vmem [shape: bf16[128,128], index: 2, kind: input, shape index: {}]
  %s3 = inlined_call_operand.vmem [shape: bf16[128,128], index: 3, kind: input, shape index: {}]
  %s4 = inlined_call_operand.vmem [shape: f32[3,128], index: 4, kind: input, shape index: {}]
  %s5 = inlined_call_operand.vmem [shape: f32[256,128], index: 5, kind: output, shape index: {}]
  %s6 = sld [smem:[#allocation0]]
  $region53: #{_lambda_.1} parent=0
    _
  %s8 = ssub.s32 1, %s6
  %s9 = scalar_select 0, %s8, %s6
  loop: start=0, step=1, limit=4
  $region2: #{_lambda_.1} parent=0 // loop_pre_header
    _
  $region3: #{_lambda_.1} parent=0 // loop_header
    %s11 = sphi 0, %s15
    %p12 = scmp.ge.s32.totalorder %s11, 4
    %s21 = sphi 0, %s23
    %s24 = sphi 0, %s21
    %s25 = sphi 0, %s24
    %s41 = sphi 0, %s25
    %s45 = sphi 0, %s45
    %s47 = sphi 0, %s45
    %s48 = sphi 0, %s47
    %s62 = sphi 0, %s48
    %s66 = sphi 0, %s66
    %s68 = sphi 0, %s66
    %s69 = sphi 0, %s68
    %s83 = sphi 0, %s69
    %s87 = sphi 0, %s87
    %s89 = sphi 0, %s87
    %s90 = sphi 0, %s89
    %s104 = sphi 0, %s90
    %s108 = sphi 0, %s108
    %s110 = sphi 0, %s108
    %s111 = sphi 0, %s110
    %s125 = sphi 0, %s111
    %s131 = sphi 0, %s133
    %s134 = sphi 0, %s131
    %s135 = sphi 0, %s134
    %s151 = sphi 0, %s135
  $region4: #{_lambda_.1} parent=0 // loop_header_branch
    %14 = sbr.rel (%p12) target = $region8
  $region5: #{_lambda_.1} parent=0 // loop_body
    %s16 = ssub.s32 %s11, 1
    %s17 = ssub.s32 %s11, 2
    %s18 = sadd.s32 %s11, 1
    %s19 = ssub.s32 %s11, %s18
    %p20 = scmp.eq.s32.totalorder %s19, 0
    %s22 = sadd.s32 %s21, 1
    %s23 = scalar_select %p20, %s21, %s22
    %p26 = pneg %p20
    %p27 = scmp.eq.s32.totalorder %s11, 1
    %p28 = por %p26, %p27
    %p29 = scmp.ne.s32.totalorder %s21, %s24
    %p30 = scmp.eq.s32.totalorder %s11, 0
    %p31 = por %p29, %p30
    %p32 = scmp.ne.s32.totalorder %s21, %s24
    %p33 = scmp.eq.s32.totalorder %s16, 1
    %p34 = por %p32, %p33
    %p35 = scmp.ne.s32.totalorder %s24, %s25
    %p36 = scmp.eq.s32.totalorder %s16, 0
    %p37 = por %p35, %p36
    %p38 = scmp.ne.s32.totalorder %s24, %s25
    %p39 = scmp.eq.s32.totalorder %s17, 1
    %p40 = por %p38, %p39
    %p42 = scmp.ne.s32.totalorder %s25, %s41
    %p43 = scmp.eq.s32.totalorder %s17, 0
    %p44 = por %p42, %p43
    %s46 = sadd.s32 %s45, 1
    %p49 = scmp.eq.s32.totalorder %s11, 1
    %p50 = scmp.ne.s32.totalorder %s45, %s47
    %p51 = scmp.eq.s32.totalorder %s11, 0
    %p52 = por %p50, %p51
    %p53 = scmp.ne.s32.totalorder %s45, %s47
    %p54 = scmp.eq.s32.totalorder %s16, 1
    %p55 = por %p53, %p54
    %p56 = scmp.ne.s32.totalorder %s47, %s48
    %p57 = scmp.eq.s32.totalorder %s16, 0
    %p58 = por %p56, %p57
    %p59 = scmp.ne.s32.totalorder %s47, %s48
    %p60 = scmp.eq.s32.totalorder %s17, 1
    %p61 = por %p59, %p60
    %p63 = scmp.ne.s32.totalorder %s48, %s62
    %p64 = scmp.eq.s32.totalorder %s17, 0
    %p65 = por %p63, %p64
    %s67 = sadd.s32 %s66, 1
    %p70 = scmp.eq.s32.totalorder %s11, 1
    %p71 = scmp.ne.s32.totalorder %s66, %s68
    %p72 = scmp.eq.s32.totalorder %s11, 0
    %p73 = por %p71, %p72
    %p74 = scmp.ne.s32.totalorder %s66, %s68
    %p75 = scmp.eq.s32.totalorder %s16, 1
    %p76 = por %p74, %p75
    %p77 = scmp.ne.s32.totalorder %s68, %s69
    %p78 = scmp.eq.s32.totalorder %s16, 0
    %p79 = por %p77, %p78
    %p80 = scmp.ne.s32.totalorder %s68, %s69
    %p81 = scmp.eq.s32.totalorder %s17, 1
    %p82 = por %p80, %p81
    %p84 = scmp.ne.s32.totalorder %s69, %s83
    %p85 = scmp.eq.s32.totalorder %s17, 0
    %p86 = por %p84, %p85
    %s88 = sadd.s32 %s87, 1
    %p91 = scmp.eq.s32.totalorder %s11, 1
    %p92 = scmp.ne.s32.totalorder %s87, %s89
    %p93 = scmp.eq.s32.totalorder %s11, 0
    %p94 = por %p92, %p93
    %p95 = scmp.ne.s32.totalorder %s87, %s89
    %p96 = scmp.eq.s32.totalorder %s16, 1
    %p97 = por %p95, %p96
    %p98 = scmp.ne.s32.totalorder %s89, %s90
    %p99 = scmp.eq.s32.totalorder %s16, 0
    %p100 = por %p98, %p99
    %p101 = scmp.ne.s32.totalorder %s89, %s90
    %p102 = scmp.eq.s32.totalorder %s17, 1
    %p103 = por %p101, %p102
    %p105 = scmp.ne.s32.totalorder %s90, %s104
    %p106 = scmp.eq.s32.totalorder %s17, 0
    %p107 = por %p105, %p106
    %s109 = sadd.s32 %s108, 1
    %p112 = scmp.eq.s32.totalorder %s11, 1
    %p113 = scmp.ne.s32.totalorder %s108, %s110
    %p114 = scmp.eq.s32.totalorder %s11, 0
    %p115 = por %p113, %p114
    %p116 = scmp.ne.s32.totalorder %s108, %s110
    %p117 = scmp.eq.s32.totalorder %s16, 1
    %p118 = por %p116, %p117
    %p119 = scmp.ne.s32.totalorder %s110, %s111
    %p120 = scmp.eq.s32.totalorder %s16, 0
    %p121 = por %p119, %p120
    %p122 = scmp.ne.s32.totalorder %s110, %s111
    %p123 = scmp.eq.s32.totalorder %s17, 1
    %p124 = por %p122, %p123
    %p126 = scmp.ne.s32.totalorder %s111, %s125
    %p127 = scmp.eq.s32.totalorder %s17, 0
    %p128 = por %p126, %p127
    %s129 = ssub.s32 %s11, %s18
    %p130 = scmp.eq.s32.totalorder %s129, 0
    %s132 = sadd.s32 %s131, 1
    %s133 = scalar_select %p130, %s131, %s132
    %p136 = pneg %p130
    %p137 = scmp.eq.s32.totalorder %s11, 1
    %p138 = por %p136, %p137
    %p139 = scmp.ne.s32.totalorder %s131, %s134
    %p140 = scmp.eq.s32.totalorder %s11, 0
    %p141 = por %p139, %p140
    %p142 = scmp.ne.s32.totalorder %s131, %s134
    %p143 = scmp.eq.s32.totalorder %s16, 1
    %p144 = por %p142, %p143
    %p145 = scmp.ne.s32.totalorder %s134, %s135
    %p146 = scmp.eq.s32.totalorder %s16, 0
    %p147 = por %p145, %p146
    %p148 = scmp.ne.s32.totalorder %s134, %s135
    %p149 = scmp.eq.s32.totalorder %s17, 1
    %p150 = por %p148, %p149
    %p152 = scmp.ne.s32.totalorder %s135, %s151
    %p153 = scmp.eq.s32.totalorder %s17, 0
    %p154 = por %p152, %p153
    %p155 = scmp.le.s32.totalorder 1, %s11
    %p156 = scmp.lt.s32.totalorder %s11, 3
    %p157 = pnand %p155, %p156
    %p158 = pneg %p157
    // Predicated region
    $region9: #{_lambda_.1} parent=5 // pred_check
      _
    $region10: #{_lambda_.1} parent=5 // pred_check_branch
      %160 = sbr.rel (%p157) target = $region12
    $region11: #{_lambda_.1} parent=5 // pred_region
      %s161 = ssub.s32 %s11, 1
      // Predicated region
      $region13: #{_lambda_.1} parent=11 // pred_check
        %p162 = pneg %p58
      $region14: #{_lambda_.1} parent=11 // pred_check_branch
        %164 = sbr.rel (%p162) target = $region16
      $region15: #{_lambda_.1} parent=11 // pred_region
        _
      $region16: #{_lambda_.1} parent=11 // pred_fallthru
        _
      // Predicated region
      $region17: #{_lambda_.1} parent=11 // pred_check
        %p165 = pneg %p79
      $region18: #{_lambda_.1} parent=11 // pred_check_branch
        %167 = sbr.rel (%p165) target = $region20
      $region19: #{_lambda_.1} parent=11 // pred_region
        _
      $region20: #{_lambda_.1} parent=11 // pred_fallthru
        _
      // Predicated region
      $region21: #{_lambda_.1} parent=11 // pred_check
        %p168 = pneg %p100
      $region22: #{_lambda_.1} parent=11 // pred_check_branch
        %170 = sbr.rel (%p168) target = $region24
      $region23: #{_lambda_.1} parent=11 // pred_region
        _
      $region24: #{_lambda_.1} parent=11 // pred_fallthru
        _
      // Predicated region
      $region25: #{_lambda_.1} parent=11 // pred_check
        %p171 = pneg %p121
      $region26: #{_lambda_.1} parent=11 // pred_check_branch
        %173 = sbr.rel (%p171) target = $region28
      $region27: #{_lambda_.1} parent=11 // pred_region
        _
      $region28: #{_lambda_.1} parent=11 // pred_fallthru
        _
    $region12: #{_lambda_.1} parent=5 // pred_fallthru
      _
    %p174 = scmp.lt.s32.totalorder %s11, 2
    // Predicated region
    $region29: #{_lambda_.1} parent=5 // pred_check
      %p175 = pneg %p174
    $region30: #{_lambda_.1} parent=5 // pred_check_branch
      %177 = sbr.rel (%p175) target = $region32
    $region31: #{_lambda_.1} parent=5 // pred_region
      // Predicated region
      $region33: #{_lambda_.1} parent=31 // pred_check
        %p178 = pneg %p31
      $region34: #{_lambda_.1} parent=31 // pred_check_branch
        %180 = sbr.rel (%p178) target = $region36
      $region35: #{_lambda_.1} parent=31 // pred_region
        %s181 = smul.u32 16, %s11
        %p182 = scmp.lt.s32.totalorder %s181, 31
        %s183 = scalar_select %p182, %s181, 31
        %s184 = smul.addr %s183, 4
        %s185 = scalar_lea.vmem %s0, %s184
        %s186 = smul.u32 16, %s11
      $region36: #{_lambda_.1} parent=31 // pred_fallthru
        _
    $region32: #{_lambda_.1} parent=5 // pred_fallthru
      _
    %p187 = scmp.le.s32.totalorder 1, %s11
    %p188 = scmp.lt.s32.totalorder %s11, 3
    %p189 = pnand %p187, %p188
    %p190 = pneg %p189
    // Predicated region
    $region37: #{_lambda_.1} parent=5 // pred_check
      _
    $region38: #{_lambda_.1} parent=5 // pred_check_branch
      %192 = sbr.rel (%p189) target = $region40
    $region39: #{_lambda_.1} parent=5 // pred_region
      %s193 = ssub.s32 %s11, 1
      %s194 = smul.u32 16, %s16
      %p195 = scmp.lt.s32.totalorder %s194, 31
      %s196 = scalar_select %p195, %s194, 31
      %s197 = smul.addr %s196, 4
      %s198 = scalar_lea.vmem %s0, %s197
      %p199 = pneg %p37
      %p200 = pneg %p34
      %p201 = pneg %p58
      %p202 = pneg %p55
      %p203 = pneg %p79
      %p204 = pneg %p76
      %p205 = pneg %p100
      %p206 = pneg %p97
      %p207 = pneg %p121
      %p208 = pneg %p118
      %p209 = pneg %p147
      %p210 = pneg %p144
      %s211 = smul.u32 16, %s16
      %p212 = scmp.lt.s32.totalorder %s211, 31
      %s213 = scalar_select %p212, %s211, 31
      %s214 = smul.addr %s213, 8
      %s215 = scalar_lea.vmem %s5, %s214
      %s216 = smul.u32 16, %s16
      %p217 = scmp.lt.s32.totalorder %s216, 31
      %s218 = scalar_select %p217, %s216, 31
      %s219 = smul.addr %s218, 4
      %s220 = scalar_lea.vmem %s0, %s219
      %s221 = smul.u32 16, %s16
      %s222 = smul.u32 16, %s16
      %p223 = scmp.lt.s32.totalorder %s222, 31
      %s224 = scalar_select %p223, %s222, 31
      %s225 = smul.addr %s224, 8
      %s226 = scalar_lea.vmem %s5, %s225
      %s227 = smul.u32 16, %s16
      %v229 = vld [vmem:[%s4] sm:$0x7]
      %v230 = vld [vmem:[%s220] sm:$0xf]
      %v231 = vld [vmem:[%s220 + $0x4] sm:$0xf]
      %v232 = vld [vmem:[%s220 + $0x8] sm:$0xf]
      %v233 = vld [vmem:[%s220 + $0xc] sm:$0xf]
      %v234 = vld [vmem:[%s220 + $0x10] sm:$0xf]
      %v235 = vld [vmem:[%s220 + $0x14] sm:$0xf]
      %v236 = vld [vmem:[%s220 + $0x18] sm:$0xf]
      %v237 = vld [vmem:[%s220 + $0x1c] sm:$0xf]
      %v238 = vld [vmem:[%s220 + $0x20] sm:$0xf]
      %v239 = vld [vmem:[%s220 + $0x24] sm:$0xf]
      %v240 = vld [vmem:[%s220 + $0x28] sm:$0xf]
      %v241 = vld [vmem:[%s220 + $0x2c] sm:$0xf]
      %v242 = vld [vmem:[%s220 + $0x30] sm:$0xf]
      %v243 = vld [vmem:[%s220 + $0x34] sm:$0xf]
      %v244 = vld [vmem:[%s220 + $0x38] sm:$0xf]
      %v245 = vld [vmem:[%s220 + $0x3c] sm:$0xf]
      %v246 = vld [vmem:[%s1] sm:$0xf]
      %v247 = vld [vmem:[%s1 + $0x4] sm:$0xf]
      %v248 = vlaneseq
      %v249 = vshrl.u32 %v248, 7
      %v250 = vsub.s32 0, %v249
      %v251 = vrot.slane %v229, %v250
      %v268 = vunpack.c.l.b16 %v230
      %v269 = vunpack.c.l.b16 %v231
      %v270 = vunpack.c.l.b16 %v232
      %v271 = vunpack.c.l.b16 %v233
      %v272 = vunpack.c.l.b16 %v234
      %v273 = vunpack.c.l.b16 %v235
      %v274 = vunpack.c.l.b16 %v236
      %v275 = vunpack.c.l.b16 %v237
      %v276 = vunpack.c.l.b16 %v238
      %v277 = vunpack.c.l.b16 %v239
      %v278 = vunpack.c.l.b16 %v240
      %v279 = vunpack.c.l.b16 %v241
      %v280 = vunpack.c.l.b16 %v242
      %v281 = vunpack.c.l.b16 %v243
      %v282 = vunpack.c.l.b16 %v244
      %v283 = vunpack.c.l.b16 %v245
      %v284 = vpack.c.b16 %v269, %v268
      %v285 = vpack.c.b16 %v271, %v270
      %v286 = vpack.c.b16 %v273, %v272
      %v287 = vpack.c.b16 %v275, %v274
      %v288 = vpack.c.b16 %v277, %v276
      %v289 = vpack.c.b16 %v279, %v278
      %v290 = vpack.c.b16 %v281, %v280
      %v291 = vpack.c.b16 %v283, %v282
      %v294 = vunpack.c.l.b16 %v246
      %v295 = vunpack.c.l.b16 %v247
      %v296 = vpack.c.b16 %v295, %v294
      %vm298 = vcmask 130048
      %v300 = vsel %vm298, %v284, 0
      %v303 = vsel %vm298, %v285, 0
      %v306 = vsel %vm298, %v286, 0
      %v309 = vsel %vm298, %v287, 0
      %v312 = vsel %vm298, %v288, 0
      %v315 = vsel %vm298, %v289, 0
      %v318 = vsel %vm298, %v290, 0
      %v321 = vsel %vm298, %v291, 0
      %323 = vmatprep.subr.bf16.mxu0 0
      %324 = vmatpush1.bf16.msra.mxu0 0
      %325 = vmatprep.subr.bf16.mxu0 0
      %326 = vmatpush1.bf16.msra.mxu0 0
      %327 = vmatprep.subr.bf16.mxu0 0
      %328 = vmatpush1.bf16.msra.mxu0 0
      %329 = vmatprep.subr.bf16.mxu0 0
      %330 = vmatpush1.bf16.msra.mxu0 0
      %331 = vmatprep.subr.bf16.mxu0 0
      %332 = vmatpush1.bf16.msra.mxu0 0
      %333 = vmatprep.subr.bf16.mxu0 0
      %334 = vmatpush1.bf16.msra.mxu0 0
      %335 = vmatprep.subr.bf16.mxu0 0
      %336 = vmatpush1.bf16.msra.mxu0 0
      %337 = vmatprep.subr.bf16.mxu0 0
      %338 = vmatpush1.bf16.msra.mxu0 %v296
      %339 = vmatprep.subr.bf16.mxu0 0
      %340 = vmatpush2.bf16.msra.mxu0 0
      %341 = vmatprep.subr.bf16.mxu0 0
      %342 = vmatpush2.bf16.msra.mxu0 0
      %343 = vmatprep.subr.bf16.mxu0 0
      %344 = vmatpush2.bf16.msra.mxu0 0
      %345 = vmatprep.subr.bf16.mxu0 0
      %346 = vmatpush2.bf16.msra.mxu0 0
      %347 = vmatprep.subr.bf16.mxu0 0
      %348 = vmatpush2.bf16.msra.mxu0 0
      %349 = vmatprep.subr.bf16.mxu0 0
      %350 = vmatpush2.bf16.msra.mxu0 0
      %351 = vmatprep.subr.bf16.mxu0 0
      %352 = vmatpush2.bf16.msra.mxu0 0
      %353 = vmatprep.subr.bf16.mxu0 0
      %354 = vmatpush2.bf16.msra.mxu0 0
      %355 = vmatprep.mubr.bf16.mxu0 0
      %356 = vmatmul.mubr.bf16.gmra.mxu0 %v300
      %v357 = vpop.f32.mrf.mxu0
      %v358 = vadd.f32 %v251, %v357
      %v359 = vpop.f32.mrf.mxu0
      %v360 = vpop.f32.mrf.mxu0
      %v361 = vadd.f32 %v251, %v360
      %v362 = vpop.f32.mrf.mxu0
      %363 = vmatprep.mubr.bf16.mxu0 0
      %364 = vmatmul.mubr.bf16.gmra.mxu0 %v303
      %v365 = vpop.f32.mrf.mxu0
      %v366 = vadd.f32 %v251, %v365
      %v367 = vpop.f32.mrf.mxu0
      %v368 = vpop.f32.mrf.mxu0
      %v369 = vadd.f32 %v251, %v368
      %v370 = vpop.f32.mrf.mxu0
      %371 = vmatprep.mubr.bf16.mxu0 0
      %372 = vmatmul.mubr.bf16.gmra.mxu0 %v306
      %v373 = vpop.f32.mrf.mxu0
      %v374 = vadd.f32 %v251, %v373
      %v375 = vpop.f32.mrf.mxu0
      %v376 = vpop.f32.mrf.mxu0
      %v377 = vadd.f32 %v251, %v376
      %v378 = vpop.f32.mrf.mxu0
      %379 = vmatprep.mubr.bf16.mxu0 0
      %380 = vmatmul.mubr.bf16.gmra.mxu0 %v309
      %v381 = vpop.f32.mrf.mxu0
      %v382 = vadd.f32 %v251, %v381
      %v383 = vpop.f32.mrf.mxu0
      %v384 = vpop.f32.mrf.mxu0
      %v385 = vadd.f32 %v251, %v384
      %v386 = vpop.f32.mrf.mxu0
      %387 = vmatprep.mubr.bf16.mxu0 0
      %388 = vmatmul.mubr.bf16.gmra.mxu0 %v312
      %v389 = vpop.f32.mrf.mxu0
      %v390 = vadd.f32 %v251, %v389
      %v391 = vpop.f32.mrf.mxu0
      %v392 = vpop.f32.mrf.mxu0
      %v393 = vadd.f32 %v251, %v392
      %v394 = vpop.f32.mrf.mxu0
      %395 = vmatprep.mubr.bf16.mxu0 0
      %396 = vmatmul.mubr.bf16.gmra.mxu0 %v315
      %v397 = vpop.f32.mrf.mxu0
      %v398 = vadd.f32 %v251, %v397
      %v399 = vpop.f32.mrf.mxu0
      %v400 = vpop.f32.mrf.mxu0
      %v401 = vadd.f32 %v251, %v400
      %v402 = vpop.f32.mrf.mxu0
      %403 = vmatprep.mubr.bf16.mxu0 0
      %404 = vmatmul.mubr.bf16.gmra.mxu0 %v318
      %v405 = vpop.f32.mrf.mxu0
      %v406 = vadd.f32 %v251, %v405
      %v407 = vpop.f32.mrf.mxu0
      %v408 = vpop.f32.mrf.mxu0
      %v409 = vadd.f32 %v251, %v408
      %v410 = vpop.f32.mrf.mxu0
      %411 = vmatprep.mubr.bf16.mxu0 0
      %412 = vmatmul.mubr.bf16.gmra.mxu0 %v321
      %v413 = vpop.f32.mrf.mxu0
      %v414 = vadd.f32 %v251, %v413
      %v415 = vpop.f32.mrf.mxu0
      %v416 = vpop.f32.mrf.mxu0
      %v417 = vadd.f32 %v251, %v416
      %v418 = vpop.f32.mrf.mxu0
      %419 = vdwg.mxu0
      %v420 = vmax.f32 %v358, 0.0
      %v421 = vmax.f32 %v361, 0.0
      %v422 = vmax.f32 %v366, 0.0
      %v423 = vmax.f32 %v369, 0.0
      %v424 = vmax.f32 %v374, 0.0
      %v425 = vmax.f32 %v377, 0.0
      %v426 = vmax.f32 %v382, 0.0
      %v427 = vmax.f32 %v385, 0.0
      %v428 = vmax.f32 %v390, 0.0
      %v429 = vmax.f32 %v393, 0.0
      %v430 = vmax.f32 %v398, 0.0
      %v431 = vmax.f32 %v401, 0.0
      %v432 = vmax.f32 %v406, 0.0
      %v433 = vmax.f32 %v409, 0.0
      %v434 = vmax.f32 %v414, 0.0
      %v435 = vmax.f32 %v417, 0.0
      %v436 = vpack.c.bf16 %v421, %v420
      %v437 = vpack.c.bf16 %v423, %v422
      %v438 = vpack.c.bf16 %v425, %v424
      %v439 = vpack.c.bf16 %v427, %v426
      %v440 = vpack.c.bf16 %v429, %v428
      %v441 = vpack.c.bf16 %v431, %v430
      %v442 = vpack.c.bf16 %v433, %v432
      %v443 = vpack.c.bf16 %v435, %v434
      %v444 = vld [vmem:[%s2] sm:$0xf]
      %v445 = vld [vmem:[%s2 + $0x4] sm:$0xf]
      %v446 = vld [vmem:[%s2 + $0x8] sm:$0xf]
      %v447 = vld [vmem:[%s2 + $0xc] sm:$0xf]
      %v448 = vld [vmem:[%s2 + $0x10] sm:$0xf]
      %v449 = vld [vmem:[%s2 + $0x14] sm:$0xf]
      %v450 = vld [vmem:[%s2 + $0x18] sm:$0xf]
      %v451 = vld [vmem:[%s2 + $0x1c] sm:$0xf]
      %v452 = vld [vmem:[%s2 + $0x20] sm:$0xf]
      %v453 = vld [vmem:[%s2 + $0x24] sm:$0xf]
      %v454 = vld [vmem:[%s2 + $0x28] sm:$0xf]
      %v455 = vld [vmem:[%s2 + $0x2c] sm:$0xf]
      %v456 = vld [vmem:[%s2 + $0x30] sm:$0xf]
      %v457 = vld [vmem:[%s2 + $0x34] sm:$0xf]
      %v458 = vld [vmem:[%s2 + $0x38] sm:$0xf]
      %v459 = vld [vmem:[%s2 + $0x3c] sm:$0xf]
      %v460 = vlaneseq
      %v461 = vshrl.u32 %v460, 7
      %v462 = vsub.s32 1, %v461
      %v463 = vrot.slane %v229, %v462
      %v480 = vunpack.c.l.b16 %v444
      %v481 = vunpack.c.l.b16 %v445
      %v482 = vunpack.c.l.b16 %v446
      %v483 = vunpack.c.l.b16 %v447
      %v484 = vunpack.c.l.b16 %v448
      %v485 = vunpack.c.l.b16 %v449
      %v486 = vunpack.c.l.b16 %v450
      %v487 = vunpack.c.l.b16 %v451
      %v488 = vunpack.c.l.b16 %v452
      %v489 = vunpack.c.l.b16 %v453
      %v490 = vunpack.c.l.b16 %v454
      %v491 = vunpack.c.l.b16 %v455
      %v492 = vunpack.c.l.b16 %v456
      %v493 = vunpack.c.l.b16 %v457
      %v494 = vunpack.c.l.b16 %v458
      %v495 = vunpack.c.l.b16 %v459
      %v496 = vpack.c.b16 %v481, %v480
      %v497 = vpack.c.b16 %v483, %v482
      %v498 = vpack.c.b16 %v485, %v484
      %v499 = vpack.c.b16 %v487, %v486
      %v500 = vpack.c.b16 %v489, %v488
      %v501 = vpack.c.b16 %v491, %v490
      %v502 = vpack.c.b16 %v493, %v492
      %v503 = vpack.c.b16 %v495, %v494
      %512 = vmatprep.subr.bf16.mxu0 0
      %513 = vmatpush1.bf16.msra.mxu0 %v503
      %514 = vmatprep.subr.bf16.mxu0 0
      %515 = vmatpush1.bf16.msra.mxu0 %v502
      %516 = vmatprep.subr.bf16.mxu0 0
      %517 = vmatpush1.bf16.msra.mxu0 %v501
      %518 = vmatprep.subr.bf16.mxu0 0
      %519 = vmatpush1.bf16.msra.mxu0 %v500
      %520 = vmatprep.subr.bf16.mxu0 0
      %521 = vmatpush1.bf16.msra.mxu0 %v499
      %522 = vmatprep.subr.bf16.mxu0 0
      %523 = vmatpush1.bf16.msra.mxu0 %v498
      %524 = vmatprep.subr.bf16.mxu0 0
      %525 = vmatpush1.bf16.msra.mxu0 %v497
      %526 = vmatprep.subr.bf16.mxu0 0
      %527 = vmatpush1.bf16.msra.mxu0 %v496
      %528 = vmatprep.subr.bf16.mxu0 0
      %529 = vmatpush2.bf16.msra.mxu0 0
      %530 = vmatprep.subr.bf16.mxu0 0
      %531 = vmatpush2.bf16.msra.mxu0 0
      %532 = vmatprep.subr.bf16.mxu0 0
      %533 = vmatpush2.bf16.msra.mxu0 0
      %534 = vmatprep.subr.bf16.mxu0 0
      %535 = vmatpush2.bf16.msra.mxu0 0
      %536 = vmatprep.subr.bf16.mxu0 0
      %537 = vmatpush2.bf16.msra.mxu0 0
      %538 = vmatprep.subr.bf16.mxu0 0
      %539 = vmatpush2.bf16.msra.mxu0 0
      %540 = vmatprep.subr.bf16.mxu0 0
      %541 = vmatpush2.bf16.msra.mxu0 0
      %542 = vmatprep.subr.bf16.mxu0 0
      %543 = vmatpush2.bf16.msra.mxu0 0
      %544 = vmatprep.mubr.bf16.mxu0 0
      %545 = vmatmul.mubr.bf16.gmra.mxu0 %v436
      %v546 = vpop.f32.mrf.mxu0
      %v547 = vadd.f32 %v463, %v546
      %v548 = vpop.f32.mrf.mxu0
      %v549 = vpop.f32.mrf.mxu0
      %v550 = vadd.f32 %v463, %v549
      %v551 = vpop.f32.mrf.mxu0
      %552 = vmatprep.mubr.bf16.mxu0 0
      %553 = vmatmul.mubr.bf16.gmra.mxu0 %v437
      %v554 = vpop.f32.mrf.mxu0
      %v555 = vadd.f32 %v463, %v554
      %v556 = vpop.f32.mrf.mxu0
      %v557 = vpop.f32.mrf.mxu0
      %v558 = vadd.f32 %v463, %v557
      %v559 = vpop.f32.mrf.mxu0
      %560 = vmatprep.mubr.bf16.mxu0 0
      %561 = vmatmul.mubr.bf16.gmra.mxu0 %v438
      %v562 = vpop.f32.mrf.mxu0
      %v563 = vadd.f32 %v463, %v562
      %v564 = vpop.f32.mrf.mxu0
      %v565 = vpop.f32.mrf.mxu0
      %v566 = vadd.f32 %v463, %v565
      %v567 = vpop.f32.mrf.mxu0
      %568 = vmatprep.mubr.bf16.mxu0 0
      %569 = vmatmul.mubr.bf16.gmra.mxu0 %v439
      %v570 = vpop.f32.mrf.mxu0
      %v571 = vadd.f32 %v463, %v570
      %v572 = vpop.f32.mrf.mxu0
      %v573 = vpop.f32.mrf.mxu0
      %v574 = vadd.f32 %v463, %v573
      %v575 = vpop.f32.mrf.mxu0
      %576 = vmatprep.mubr.bf16.mxu0 0
      %577 = vmatmul.mubr.bf16.gmra.mxu0 %v440
      %v578 = vpop.f32.mrf.mxu0
      %v579 = vadd.f32 %v463, %v578
      %v580 = vpop.f32.mrf.mxu0
      %v581 = vpop.f32.mrf.mxu0
      %v582 = vadd.f32 %v463, %v581
      %v583 = vpop.f32.mrf.mxu0
      %584 = vmatprep.mubr.bf16.mxu0 0
      %585 = vmatmul.mubr.bf16.gmra.mxu0 %v441
      %v586 = vpop.f32.mrf.mxu0
      %v587 = vadd.f32 %v463, %v586
      %v588 = vpop.f32.mrf.mxu0
      %v589 = vpop.f32.mrf.mxu0
      %v590 = vadd.f32 %v463, %v589
      %v591 = vpop.f32.mrf.mxu0
      %592 = vmatprep.mubr.bf16.mxu0 0
      %593 = vmatmul.mubr.bf16.gmra.mxu0 %v442
      %v594 = vpop.f32.mrf.mxu0
      %v595 = vadd.f32 %v463, %v594
      %v596 = vpop.f32.mrf.mxu0
      %v597 = vpop.f32.mrf.mxu0
      %v598 = vadd.f32 %v463, %v597
      %v599 = vpop.f32.mrf.mxu0
      %600 = vmatprep.mubr.bf16.mxu0 0
      %601 = vmatmul.mubr.bf16.gmra.mxu0 %v443
      %v602 = vpop.f32.mrf.mxu0
      %v603 = vadd.f32 %v463, %v602
      %v604 = vpop.f32.mrf.mxu0
      %v605 = vpop.f32.mrf.mxu0
      %v606 = vadd.f32 %v463, %v605
      %v607 = vpop.f32.mrf.mxu0
      %608 = vdwg.mxu0
      %v609 = vmax.f32 %v547, 0.0
      %v610 = vmax.f32 %v550, 0.0
      %v611 = vmax.f32 %v555, 0.0
      %v612 = vmax.f32 %v558, 0.0
      %v613 = vmax.f32 %v563, 0.0
      %v614 = vmax.f32 %v566, 0.0
      %v615 = vmax.f32 %v571, 0.0
      %v616 = vmax.f32 %v574, 0.0
      %v617 = vmax.f32 %v579, 0.0
      %v618 = vmax.f32 %v582, 0.0
      %v619 = vmax.f32 %v587, 0.0
      %v620 = vmax.f32 %v590, 0.0
      %v621 = vmax.f32 %v595, 0.0
      %v622 = vmax.f32 %v598, 0.0
      %v623 = vmax.f32 %v603, 0.0
      %v624 = vmax.f32 %v606, 0.0
      %v625 = vpack.c.bf16 %v610, %v609
      %v626 = vpack.c.bf16 %v612, %v611
      %v627 = vpack.c.bf16 %v614, %v613
      %v628 = vpack.c.bf16 %v616, %v615
      %v629 = vpack.c.bf16 %v618, %v617
      %v630 = vpack.c.bf16 %v620, %v619
      %v631 = vpack.c.bf16 %v622, %v621
      %v632 = vpack.c.bf16 %v624, %v623
      %v633 = vld [vmem:[%s3] sm:$0xf]
      %v634 = vld [vmem:[%s3 + $0x4] sm:$0xf]
      %v635 = vld [vmem:[%s3 + $0x8] sm:$0xf]
      %v636 = vld [vmem:[%s3 + $0xc] sm:$0xf]
      %v637 = vld [vmem:[%s3 + $0x10] sm:$0xf]
      %v638 = vld [vmem:[%s3 + $0x14] sm:$0xf]
      %v639 = vld [vmem:[%s3 + $0x18] sm:$0xf]
      %v640 = vld [vmem:[%s3 + $0x1c] sm:$0xf]
      %v641 = vld [vmem:[%s3 + $0x20] sm:$0xf]
      %v642 = vld [vmem:[%s3 + $0x24] sm:$0xf]
      %v643 = vld [vmem:[%s3 + $0x28] sm:$0xf]
      %v644 = vld [vmem:[%s3 + $0x2c] sm:$0xf]
      %v645 = vld [vmem:[%s3 + $0x30] sm:$0xf]
      %v646 = vld [vmem:[%s3 + $0x34] sm:$0xf]
      %v647 = vld [vmem:[%s3 + $0x38] sm:$0xf]
      %v648 = vld [vmem:[%s3 + $0x3c] sm:$0xf]
      %v649 = vlaneseq
      %v650 = vshrl.u32 %v649, 7
      %v651 = vsub.s32 2, %v650
      %v652 = vrot.slane %v229, %v651
      %v669 = vunpack.c.l.b16 %v633
      %v670 = vunpack.c.l.b16 %v634
      %v671 = vunpack.c.l.b16 %v635
      %v672 = vunpack.c.l.b16 %v636
      %v673 = vunpack.c.l.b16 %v637
      %v674 = vunpack.c.l.b16 %v638
      %v675 = vunpack.c.l.b16 %v639
      %v676 = vunpack.c.l.b16 %v640
      %v677 = vunpack.c.l.b16 %v641
      %v678 = vunpack.c.l.b16 %v642
      %v679 = vunpack.c.l.b16 %v643
      %v680 = vunpack.c.l.b16 %v644
      %v681 = vunpack.c.l.b16 %v645
      %v682 = vunpack.c.l.b16 %v646
      %v683 = vunpack.c.l.b16 %v647
      %v684 = vunpack.c.l.b16 %v648
      %v685 = vpack.c.b16 %v670, %v669
      %v686 = vpack.c.b16 %v672, %v671
      %v687 = vpack.c.b16 %v674, %v673
      %v688 = vpack.c.b16 %v676, %v675
      %v689 = vpack.c.b16 %v678, %v677
      %v690 = vpack.c.b16 %v680, %v679
      %v691 = vpack.c.b16 %v682, %v681
      %v692 = vpack.c.b16 %v684, %v683
      %701 = vmatprep.subr.bf16.mxu0 0
      %702 = vmatpush1.bf16.msra.mxu0 %v692
      %703 = vmatprep.subr.bf16.mxu0 0
      %704 = vmatpush1.bf16.msra.mxu0 %v691
      %705 = vmatprep.subr.bf16.mxu0 0
      %706 = vmatpush1.bf16.msra.mxu0 %v690
      %707 = vmatprep.subr.bf16.mxu0 0
      %708 = vmatpush1.bf16.msra.mxu0 %v689
      %709 = vmatprep.subr.bf16.mxu0 0
      %710 = vmatpush1.bf16.msra.mxu0 %v688
      %711 = vmatprep.subr.bf16.mxu0 0
      %712 = vmatpush1.bf16.msra.mxu0 %v687
      %713 = vmatprep.subr.bf16.mxu0 0
      %714 = vmatpush1.bf16.msra.mxu0 %v686
      %715 = vmatprep.subr.bf16.mxu0 0
      %716 = vmatpush1.bf16.msra.mxu0 %v685
      %717 = vmatprep.subr.bf16.mxu0 0
      %718 = vmatpush2.bf16.msra.mxu0 0
      %719 = vmatprep.subr.bf16.mxu0 0
      %720 = vmatpush2.bf16.msra.mxu0 0
      %721 = vmatprep.subr.bf16.mxu0 0
      %722 = vmatpush2.bf16.msra.mxu0 0
      %723 = vmatprep.subr.bf16.mxu0 0
      %724 = vmatpush2.bf16.msra.mxu0 0
      %725 = vmatprep.subr.bf16.mxu0 0
      %726 = vmatpush2.bf16.msra.mxu0 0
      %727 = vmatprep.subr.bf16.mxu0 0
      %728 = vmatpush2.bf16.msra.mxu0 0
      %729 = vmatprep.subr.bf16.mxu0 0
      %730 = vmatpush2.bf16.msra.mxu0 0
      %731 = vmatprep.subr.bf16.mxu0 0
      %732 = vmatpush2.bf16.msra.mxu0 0
      %733 = vmatprep.mubr.bf16.mxu0 0
      %734 = vmatmul.mubr.bf16.gmra.mxu0 %v625
      %v735 = vpop.f32.mrf.mxu0
      %v736 = vadd.f32 %v652, %v735
      %v737 = vpop.f32.mrf.mxu0
      %v738 = vpop.f32.mrf.mxu0
      %v739 = vadd.f32 %v652, %v738
      %v740 = vpop.f32.mrf.mxu0
      %741 = vmatprep.mubr.bf16.mxu0 0
      %742 = vmatmul.mubr.bf16.gmra.mxu0 %v626
      %v743 = vpop.f32.mrf.mxu0
      %v744 = vadd.f32 %v652, %v743
      %v745 = vpop.f32.mrf.mxu0
      %v746 = vpop.f32.mrf.mxu0
      %v747 = vadd.f32 %v652, %v746
      %v748 = vpop.f32.mrf.mxu0
      %749 = vmatprep.mubr.bf16.mxu0 0
      %750 = vmatmul.mubr.bf16.gmra.mxu0 %v627
      %v751 = vpop.f32.mrf.mxu0
      %v752 = vadd.f32 %v652, %v751
      %v753 = vpop.f32.mrf.mxu0
      %v754 = vpop.f32.mrf.mxu0
      %v755 = vadd.f32 %v652, %v754
      %v756 = vpop.f32.mrf.mxu0
      %757 = vmatprep.mubr.bf16.mxu0 0
      %758 = vmatmul.mubr.bf16.gmra.mxu0 %v628
      %v759 = vpop.f32.mrf.mxu0
      %v760 = vadd.f32 %v652, %v759
      %v761 = vpop.f32.mrf.mxu0
      %v762 = vpop.f32.mrf.mxu0
      %v763 = vadd.f32 %v652, %v762
      %v764 = vpop.f32.mrf.mxu0
      %765 = vmatprep.mubr.bf16.mxu0 0
      %766 = vmatmul.mubr.bf16.gmra.mxu0 %v629
      %v767 = vpop.f32.mrf.mxu0
      %v768 = vadd.f32 %v652, %v767
      %v769 = vpop.f32.mrf.mxu0
      %v770 = vpop.f32.mrf.mxu0
      %v771 = vadd.f32 %v652, %v770
      %v772 = vpop.f32.mrf.mxu0
      %773 = vmatprep.mubr.bf16.mxu0 0
      %774 = vmatmul.mubr.bf16.gmra.mxu0 %v630
      %v775 = vpop.f32.mrf.mxu0
      %v776 = vadd.f32 %v652, %v775
      %v777 = vpop.f32.mrf.mxu0
      %v778 = vpop.f32.mrf.mxu0
      %v779 = vadd.f32 %v652, %v778
      %v780 = vpop.f32.mrf.mxu0
      %781 = vmatprep.mubr.bf16.mxu0 0
      %782 = vmatmul.mubr.bf16.gmra.mxu0 %v631
      %v783 = vpop.f32.mrf.mxu0
      %v784 = vadd.f32 %v652, %v783
      %v785 = vpop.f32.mrf.mxu0
      %v786 = vpop.f32.mrf.mxu0
      %v787 = vadd.f32 %v652, %v786
      %v788 = vpop.f32.mrf.mxu0
      %789 = vmatprep.mubr.bf16.mxu0 0
      %790 = vmatmul.mubr.bf16.gmra.mxu0 %v632
      %v791 = vpop.f32.mrf.mxu0
      %v792 = vadd.f32 %v652, %v791
      %v793 = vpop.f32.mrf.mxu0
      %v794 = vpop.f32.mrf.mxu0
      %v795 = vadd.f32 %v652, %v794
      %v796 = vpop.f32.mrf.mxu0
      %797 = vdwg.mxu0
      %798 = vst [vmem:[%s226] sm:$0xff] %v736
      %799 = vst [vmem:[%s226 + $0x8] sm:$0xff] %v739
      %800 = vst [vmem:[%s226 + $0x10] sm:$0xff] %v744
      %801 = vst [vmem:[%s226 + $0x18] sm:$0xff] %v747
      %802 = vst [vmem:[%s226 + $0x20] sm:$0xff] %v752
      %803 = vst [vmem:[%s226 + $0x28] sm:$0xff] %v755
      %804 = vst [vmem:[%s226 + $0x30] sm:$0xff] %v760
      %805 = vst [vmem:[%s226 + $0x38] sm:$0xff] %v763
      %806 = vst [vmem:[%s226 + $0x40] sm:$0xff] %v768
      %807 = vst [vmem:[%s226 + $0x48] sm:$0xff] %v771
      %808 = vst [vmem:[%s226 + $0x50] sm:$0xff] %v776
      %809 = vst [vmem:[%s226 + $0x58] sm:$0xff] %v779
      %810 = vst [vmem:[%s226 + $0x60] sm:$0xff] %v784
      %811 = vst [vmem:[%s226 + $0x68] sm:$0xff] %v787
      %812 = vst [vmem:[%s226 + $0x70] sm:$0xff] %v792
      %813 = vst [vmem:[%s226 + $0x78] sm:$0xff] %v795
      %s814 = smul.u32 16, %s16
      %p815 = scmp.lt.s32.totalorder %s814, 31
      %s816 = scalar_select %p815, %s814, 31
      %s817 = smul.addr %s816, 8
      %s818 = scalar_lea.vmem %s5, %s817
      // Predicated region
      $region41: #{_lambda_.1} parent=39 // pred_check
        %p819 = pneg %p144
      $region42: #{_lambda_.1} parent=39 // pred_check_branch
        %821 = sbr.rel (%p819) target = $region44
      $region43: #{_lambda_.1} parent=39 // pred_region
        %s822 = smul.u32 16, %s16
      $region44: #{_lambda_.1} parent=39 // pred_fallthru
        _
    $region40: #{_lambda_.1} parent=5 // pred_fallthru
      _
    %p823 = scmp.le.s32.totalorder 2, %s11
    // Predicated region
    $region45: #{_lambda_.1} parent=5 // pred_check
      %p824 = pneg %p823
    $region46: #{_lambda_.1} parent=5 // pred_check_branch
      %826 = sbr.rel (%p824) target = $region48
    $region47: #{_lambda_.1} parent=5 // pred_region
      %s827 = ssub.s32 %s11, 2
      // Predicated region
      $region49: #{_lambda_.1} parent=47 // pred_check
        %p828 = pneg %p150
      $region50: #{_lambda_.1} parent=47 // pred_check_branch
        %830 = sbr.rel (%p828) target = $region52
      $region51: #{_lambda_.1} parent=47 // pred_region
        %s831 = smul.u32 16, %s17
        %p832 = scmp.lt.s32.totalorder %s831, 31
        %s833 = scalar_select %p832, %s831, 31
        %s834 = smul.addr %s833, 8
        %s835 = scalar_lea.vmem %s5, %s834
      $region52: #{_lambda_.1} parent=47 // pred_fallthru
        _
    $region48: #{_lambda_.1} parent=5 // pred_fallthru
      _
  $region6: #{_lambda_.1} parent=0 // loop_footer
    %s15 = sadd.s32 1, %s11
  $region7: #{_lambda_.1} parent=0 // loop_footer_branch
    %10 = sbr.rel target = $region3
  $region8: #{_lambda_.1} parent=0 // loop_exit
    _

</llo_original>
